<compile_context>
chip_gen: v7x
topology: tpu7x:2x2x1
jax: 0.10.0
libtpu: 0.0.40
codegen_flags: <defaults>
</compile_context>

<pallas_src>
import functools

import jax
import jax.numpy as jnp
from jax.experimental import pallas as pl
from jax.experimental.pallas import tpu as pltpu


# --------------------------------------------------------------------------- #
# Kernel
# --------------------------------------------------------------------------- #
def _recman_kernel(ids_ref, man_ref,
                   w1_ref, b1_ref, w2_ref, b2_ref, w3_ref, b3_ref,
                   out_ref,
                   *, n_hot_rows, interact_hidden, feature_hidden):
    """One batch tile.  Layout is transposed: [feature, batch] (lane = batch)."""
    tile_b = out_ref.shape[1]
    H, F = interact_hidden, feature_hidden
    th = 2 * H                                   # tower rows in fused layer-1 output

    # ---- fused embedding gather + layer 1 + manual-feature projection -------
    # two-hot mask (one user row + one item row per column), built bf16 directly.
    rows = jax.lax.broadcasted_iota(jnp.int32, (n_hot_rows, tile_b), 0)
    uid = ids_ref[0:1, :]
    iid = ids_ref[1:2, :]
    hot = ((rows == uid) | (rows == iid)).astype(jnp.bfloat16)

    # concat([two_hot ; man]) along sublanes; n_hot_rows is a multiple of 16 so
    # the boundary is vreg-aligned.
    x = jnp.concatenate([hot, man_ref[...]], axis=0)     # (n_hot+Uf+If, TILE_B) bf16

    # [[W1E, 0], [0, Wm]] @ x  -> top 2H rows: layer-1 tower, bottom 2F: manual feats.
    y = jnp.dot(w1_ref[...], x, preferred_element_type=jnp.float32) + b1_ref[...]
    y = jnp.maximum(y, 0.0)                              # (2H+2F, TILE_B) f32

    h = y[:th, :]                                        # [u_feat ; i_feat] after L1
    m = y[th:, :]                                        # [u_man  ; i_man ] (relu'd)

    def linear_relu(w_ref, b_ref, act):
        z = jnp.dot(w_ref[...], act.astype(jnp.bfloat16),
                    preferred_element_type=jnp.float32) + b_ref[...]
        return jnp.maximum(z, 0.0)

    # Fused (block-diagonal) user/item towers, layers 2 & 3.  Dropout == identity.
    h = linear_relu(w2_ref, b2_ref, h)
    h = linear_relu(w3_ref, b3_ref, h)                   # (2H, TILE_B)

    # torch.bmm((B,1,H+F),(B,H+F,1)).squeeze() == per-row dot of concatenated
    # features; in the transposed layout this is a sublane reduction whose
    # (1, TILE_B) result is already lane-dense.
    dot = (jnp.sum(h[:H, :] * h[H:, :], axis=0, keepdims=True)
           + jnp.sum(m[:F, :] * m[F:, :], axis=0, keepdims=True))
    out_ref[...] = dot.astype(out_ref.dtype)


# --------------------------------------------------------------------------- #
# Parameter packing (done once, not per call)
# --------------------------------------------------------------------------- #
def _block_diag(a, b):
    za = jnp.zeros((a.shape[0], b.shape[1]), a.dtype)
    zb = jnp.zeros((b.shape[0], a.shape[1]), b.dtype)
    return jnp.concatenate(
        [jnp.concatenate([a, za], axis=1), jnp.concatenate([zb, b], axis=1)], axis=0)


def pack_params(params, usr_num, item_num, interact_hidden, feature_hidden):
    """Block-diagonal fused weights in (out, in) orientation (kernel computes
    W @ x_T).  Layer 1 is pre-multiplied with the (transposed, block-diagonal)
    embedding table (exact by associativity) and fused with the manual-feature
    projection.  Matmul weights are bf16; biases stay f32 (added after the
    f32-accumulated matmul)."""
    bf, f32 = jnp.bfloat16, jnp.float32
    n_rows = usr_num + item_num
    n_rows_pad = ((n_rows + 15) // 16) * 16          # bf16 sublane-aligned concat boundary

    emb_bd = _block_diag(params["user_emb"].T, params["item_emb"].T)   # (Eu+Ei, n_rows)
    w1_bd = _block_diag(params["uw1"], params["iw1"])                  # (2H, Eu+Ei)
    w1e = w1_bd @ emb_bd                                               # (2H, n_rows) f32
    w1e = jnp.pad(w1e, ((0, 0), (0, n_rows_pad - n_rows)))
    wm_bd = _block_diag(params["umw"], params["imw"])                  # (2F, Uf+If)
    w1f = _block_diag(w1e, wm_bd).astype(bf)          # (2H+2F, n_rows_pad + Uf+If)
    b1f = jnp.concatenate([params["ub1"], params["ib1"],
                           params["umb"], params["imb"]]).reshape(-1, 1).astype(f32)

    packed = {
        "w1": w1f, "b1": b1f,
        "w2": _block_diag(params["uw2"], params["iw2"]).astype(bf),
        "b2": jnp.concatenate([params["ub2"], params["ib2"]]).reshape(-1, 1).astype(f32),
        "w3": _block_diag(params["uw3"], params["iw3"]).astype(bf),
        "b3": jnp.concatenate([params["ub3"], params["ib3"]]).reshape(-1, 1).astype(f32),
        "usr_num": int(usr_num),
        "item_num": int(item_num),
        "n_hot_rows": int(n_rows_pad),
        "interact_hidden": int(interact_hidden),
        "feature_hidden": int(feature_hidden),
    }
    return packed


# --------------------------------------------------------------------------- #
# Forward wrapper
# --------------------------------------------------------------------------- #
def recman_forward(packed, uid_batch, iid_batch, u_man_feature, i_man_feature,
                   *, tile_b=1024):
    B = uid_batch.shape[0]
    # Cap tile_b at ~B/2 (rounded up to 128) so v7x's two TensorCores both get
    # work when the batch allows >= 2 grid steps; never below 128 lanes.
    cap = max(128, ((B + 1) // 2 + 127) // 128 * 128)
    tile_b = max(128, min(tile_b, cap))
    num_tiles = pl.cdiv(B, tile_b)
    b_pad = num_tiles * tile_b
    pad = b_pad - B

    # Single (2, b_pad) int32 id tensor -> one DMA per grid step.
    uid = jnp.pad(uid_batch.astype(jnp.int32), (0, pad))
    # Item rows live below the user rows inside the block-diagonal table.
    iid = jnp.pad(iid_batch.astype(jnp.int32), (0, pad)) + packed["usr_num"]
    ids = jnp.stack([uid, iid], axis=0)                               # (2, b_pad)

    # Manual features: concat, pad, transpose (lane = batch), bf16 in HBM
    # (they are downcast before the MXU anyway -> halves input DMA bytes).
    man = jnp.concatenate([u_man_feature.astype(jnp.float32),
                           i_man_feature.astype(jnp.float32)], axis=1)
    man = jnp.pad(man, ((0, pad), (0, 0))).T.astype(jnp.bfloat16)     # (Uf+If, b_pad)

    weights = (packed["w1"], packed["b1"], packed["w2"], packed["b2"],
               packed["w3"], packed["b3"])

    def stream_spec(rows):
        return pl.BlockSpec((rows, tile_b), lambda b: (0, b))

    def resident_spec(arr):
        # Constant index_map -> stays VMEM-resident across batch tiles.
        return pl.BlockSpec(arr.shape, lambda b: (0, 0))

    kernel = functools.partial(
        _recman_kernel,
        n_hot_rows=packed["n_hot_rows"],
        interact_hidden=packed["interact_hidden"],
        feature_hidden=packed["feature_hidden"])

    out = pl.pallas_call(
        kernel,
        grid=(num_tiles,),
        in_specs=[stream_spec(2), stream_spec(man.shape[0])]
                 + [resident_spec(w) for w in weights],
        out_specs=stream_spec(1),
        out_shape=jax.ShapeDtypeStruct((1, b_pad), jnp.float32),
        compiler_params=pltpu.CompilerParams(
            dimension_semantics=("parallel",),
            vmem_limit_bytes=32 * 1024 * 1024),
    )(ids, man, *weights)

    return out.reshape(b_pad)[:B]                        # torch.squeeze -> (B,)


# --------------------------------------------------------------------------- #
# Synthetic parameters (PyTorch layout: W is (out, in), b is (out,))
# --------------------------------------------------------------------------- #
def init_params(key, usr_num, item_num, emb_usr_size, emb_item_size,
                usr_feature_dim, item_feature_dim,
                feature_hidden_size, interact_hidden_size):
    keys = jax.random.split(key, 20)
    k = iter(keys)

    def lin(kw, kb, fan_in, fan_out):
        bound = 1.0 / float(fan_in) ** 0.5
        w = jax.random.uniform(kw, (fan_out, fan_in), jnp.float32, -bound, bound)
        b = jax.random.uniform(kb, (fan_out,), jnp.float32, -bound, bound)
        return w, b

    p = {}
    p["user_emb"] = jax.random.normal(next(k), (usr_num, emb_usr_size), jnp.float32)
    p["item_emb"] = jax.random.normal(next(k), (item_num, emb_item_size), jnp.float32)
    p["uw1"], p["ub1"] = lin(next(k), next(k), emb_usr_size, interact_hidden_size)
    p["iw1"], p["ib1"] = lin(next(k), next(k), emb_item_size, interact_hidden_size)
    p["uw2"], p["ub2"] = lin(next(k), next(k), interact_hidden_size, interact_hidden_size)
    p["iw2"], p["ib2"] = lin(next(k), next(k), interact_hidden_size, interact_hidden_size)
    p["uw3"], p["ub3"] = lin(next(k), next(k), interact_hidden_size, interact_hidden_size)
    p["iw3"], p["ib3"] = lin(next(k), next(k), interact_hidden_size, interact_hidden_size)
    p["umw"], p["umb"] = lin(next(k), next(k), usr_feature_dim, feature_hidden_size)
    p["imw"], p["imb"] = lin(next(k), next(k), item_feature_dim, feature_hidden_size)
    return p


def _reference_forward(params, uid, iid, u_man, i_man):
    """Pure-JAX f32 reference matching the PyTorch module (eval mode)."""
    relu = lambda x: jnp.maximum(x, 0.0)
    u = params["user_emb"][uid]
    i = params["item_emb"][iid]
    u = relu(u @ params["uw1"].T + params["ub1"])
    i = relu(i @ params["iw1"].T + params["ib1"])
    u = relu(u @ params["uw2"].T + params["ub2"])
    i = relu(i @ params["iw2"].T + params["ib2"])
    u = relu(u @ params["uw3"].T + params["ub3"])
    i = relu(i @ params["iw3"].T + params["ib3"])
    um = relu(u_man.astype(jnp.float32) @ params["umw"].T + params["umb"])
    im = relu(i_man.astype(jnp.float32) @ params["imw"].T + params["imb"])
    uf = jnp.concatenate([u, um], axis=1)
    if_ = jnp.concatenate([i, im], axis=1)
    return jnp.sum(uf * if_, axis=-1)


if __name__ == "__main__":
    USR_NUM, ITEM_NUM = 64, 128
    EMB_USR, EMB_ITEM = 32, 32
    USR_FEAT_DIM, ITEM_FEAT_DIM = 16, 24
    FEATURE_HIDDEN, INTERACT_HIDDEN = 32, 32
    BATCH = 8

    root = jax.random.PRNGKey(0)
    kp, ku, ki, kuf, kif = jax.random.split(root, 5)

    params = init_params(kp, USR_NUM, ITEM_NUM, EMB_USR, EMB_ITEM,
                         USR_FEAT_DIM, ITEM_FEAT_DIM,
                         FEATURE_HIDDEN, INTERACT_HIDDEN)
    packed = pack_params(params, USR_NUM, ITEM_NUM, INTERACT_HIDDEN, FEATURE_HIDDEN)

    uid = jax.random.randint(ku, (BATCH,), 0, USR_NUM)
    iid = jax.random.randint(ki, (BATCH,), 0, ITEM_NUM)
    u_man = jax.random.normal(kuf, (BATCH, USR_FEAT_DIM), jnp.float32)
    i_man = jax.random.normal(kif, (BATCH, ITEM_FEAT_DIM), jnp.float32)

    out = recman_forward(packed, uid, iid, u_man, i_man)
    out = jax.block_until_ready(out)

    ref = _reference_forward(params, uid, iid, u_man, i_man)
    assert out.shape == (BATCH,), out.shape
    max_err = float(jnp.max(jnp.abs(out - ref)))
    # bf16 matmul inputs with f32 accumulation vs. f32 reference.
    assert jnp.allclose(out, ref, atol=1e-1, rtol=5e-2), (max_err, out, ref)

    print("KERNEL_OK")
</pallas_src>

<mosaic_0001>
module attributes {stable_mosaic.version = 11 : i64} {
  func.func @_recman_kernel(%arg0: i32, %arg1: memref<2x128xi32, #tpu.memory_space<vmem>>, %arg2: memref<40x128xbf16, #tpu.memory_space<vmem>>, %arg3: memref<128x232xbf16, #tpu.memory_space<vmem>>, %arg4: memref<128x1xf32, #tpu.memory_space<vmem>>, %arg5: memref<64x64xbf16, #tpu.memory_space<vmem>>, %arg6: memref<64x1xf32, #tpu.memory_space<vmem>>, %arg7: memref<64x64xbf16, #tpu.memory_space<vmem>>, %arg8: memref<64x1xf32, #tpu.memory_space<vmem>>, %arg9: memref<1x128xf32, #tpu.memory_space<vmem>>) attributes {dimension_semantics = [#tpu.dimension_semantics<parallel>], iteration_bounds = array<i64: 1>, scalar_prefetch = 0 : i64, scratch_operands = 0 : i64, tpu.core_type = #tpu.core_type<tc>, window_params = [{transform_indices = @transform_0, window_bounds = array<i64: 2, 128>}, {transform_indices = @transform_1, window_bounds = array<i64: 40, 128>}, {pipeline_mode = #tpu.pipeline_mode<synchronous>, transform_indices = @transform_2, window_bounds = array<i64: 128, 232>}, {pipeline_mode = #tpu.pipeline_mode<synchronous>, transform_indices = @transform_3, window_bounds = array<i64: 128, 1>}, {pipeline_mode = #tpu.pipeline_mode<synchronous>, transform_indices = @transform_4, window_bounds = array<i64: 64, 64>}, {pipeline_mode = #tpu.pipeline_mode<synchronous>, transform_indices = @transform_5, window_bounds = array<i64: 64, 1>}, {pipeline_mode = #tpu.pipeline_mode<synchronous>, transform_indices = @transform_6, window_bounds = array<i64: 64, 64>}, {pipeline_mode = #tpu.pipeline_mode<synchronous>, transform_indices = @transform_7, window_bounds = array<i64: 64, 1>}, {transform_indices = @transform_8, window_bounds = array<i64: 1, 128>}]} {
    %0 = tpu.iota {dimensions = array<i32: 0>} : vector<192x128xi32>
    %c0 = arith.constant 0 : index
    %c0_0 = arith.constant 0 : index
    %1 = vector.load %arg1[%c0, %c0_0] : memref<2x128xi32, #tpu.memory_space<vmem>>, vector<1x128xi32>
    %c1 = arith.constant 1 : index
    %c0_1 = arith.constant 0 : index
    %2 = vector.load %arg1[%c1, %c0_1] : memref<2x128xi32, #tpu.memory_space<vmem>>, vector<1x128xi32>
    %3 = vector.broadcast %1 : vector<1x128xi32> to vector<192x128xi32>
    %4 = arith.cmpi eq, %0, %3 : vector<192x128xi32>
    %5 = vector.broadcast %2 : vector<1x128xi32> to vector<192x128xi32>
    %6 = arith.cmpi eq, %0, %5 : vector<192x128xi32>
    %7 = arith.ori %4, %6 : vector<192x128xi1>
    %8 = arith.extui %7 : vector<192x128xi1> to vector<192x128xi32>
    %9 = arith.sitofp %8 : vector<192x128xi32> to vector<192x128xf32>
    %10 = arith.truncf %9 : vector<192x128xf32> to vector<192x128xbf16>
    %c0_2 = arith.constant 0 : index
    %c0_3 = arith.constant 0 : index
    %11 = vector.load %arg2[%c0_2, %c0_3] : memref<40x128xbf16, #tpu.memory_space<vmem>>, vector<40x128xbf16>
    %12 = tpu.concatenate %10, %11 in 0 : vector<192x128xbf16>, vector<40x128xbf16> -> vector<232x128xbf16>
    %c0_4 = arith.constant 0 : index
    %c0_5 = arith.constant 0 : index
    %13 = vector.load %arg3[%c0_4, %c0_5] : memref<128x232xbf16, #tpu.memory_space<vmem>>, vector<128x232xbf16>
    %cst = arith.constant dense<0.000000e+00> : vector<128x128xf32>
    %14 = tpu.matmul %13, %12, %cst {dimension_numbers = #tpu.dot_dimension_numbers<[1], [0], [0], [1], [0, 0, 1, 1], [], []>} : vector<128x232xbf16>, vector<232x128xbf16>, vector<128x128xf32> -> vector<128x128xf32>
    %c0_6 = arith.constant 0 : index
    %c0_7 = arith.constant 0 : index
    %15 = vector.load %arg4[%c0_6, %c0_7] : memref<128x1xf32, #tpu.memory_space<vmem>>, vector<128x1xf32>
    %16 = vector.broadcast %15 : vector<128x1xf32> to vector<128x128xf32>
    %17 = arith.addf %14, %16 : vector<128x128xf32>
    %cst_8 = arith.constant 0.000000e+00 : f32
    %18 = vector.broadcast %cst_8 : f32 to vector<128x128xf32>
    %19 = arith.maximumf %17, %18 : vector<128x128xf32>
    %20 = vector.extract_strided_slice %19 {offsets = [0, 0], sizes = [64, 128], strides = [1, 1]} : vector<128x128xf32> to vector<64x128xf32>
    %21 = vector.extract_strided_slice %19 {offsets = [64, 0], sizes = [64, 128], strides = [1, 1]} : vector<128x128xf32> to vector<64x128xf32>
    %c0_9 = arith.constant 0 : index
    %c0_10 = arith.constant 0 : index
    %22 = vector.load %arg5[%c0_9, %c0_10] : memref<64x64xbf16, #tpu.memory_space<vmem>>, vector<64x64xbf16>
    %23 = arith.truncf %20 : vector<64x128xf32> to vector<64x128xbf16>
    %cst_11 = arith.constant dense<0.000000e+00> : vector<64x128xf32>
    %24 = tpu.matmul %22, %23, %cst_11 {dimension_numbers = #tpu.dot_dimension_numbers<[1], [0], [0], [1], [0, 0, 1, 1], [], []>} : vector<64x64xbf16>, vector<64x128xbf16>, vector<64x128xf32> -> vector<64x128xf32>
    %c0_12 = arith.constant 0 : index
    %c0_13 = arith.constant 0 : index
    %25 = vector.load %arg6[%c0_12, %c0_13] : memref<64x1xf32, #tpu.memory_space<vmem>>, vector<64x1xf32>
    %26 = vector.broadcast %25 : vector<64x1xf32> to vector<64x128xf32>
    %27 = arith.addf %24, %26 : vector<64x128xf32>
    %cst_14 = arith.constant 0.000000e+00 : f32
    %28 = vector.broadcast %cst_14 : f32 to vector<64x128xf32>
    %29 = arith.maximumf %27, %28 : vector<64x128xf32>
    %c0_15 = arith.constant 0 : index
    %c0_16 = arith.constant 0 : index
    %30 = vector.load %arg7[%c0_15, %c0_16] : memref<64x64xbf16, #tpu.memory_space<vmem>>, vector<64x64xbf16>
    %31 = arith.truncf %29 : vector<64x128xf32> to vector<64x128xbf16>
    %cst_17 = arith.constant dense<0.000000e+00> : vector<64x128xf32>
    %32 = tpu.matmul %30, %31, %cst_17 {dimension_numbers = #tpu.dot_dimension_numbers<[1], [0], [0], [1], [0, 0, 1, 1], [], []>} : vector<64x64xbf16>, vector<64x128xbf16>, vector<64x128xf32> -> vector<64x128xf32>
    %c0_18 = arith.constant 0 : index
    %c0_19 = arith.constant 0 : index
    %33 = vector.load %arg8[%c0_18, %c0_19] : memref<64x1xf32, #tpu.memory_space<vmem>>, vector<64x1xf32>
    %34 = vector.broadcast %33 : vector<64x1xf32> to vector<64x128xf32>
    %35 = arith.addf %32, %34 : vector<64x128xf32>
    %cst_20 = arith.constant 0.000000e+00 : f32
    %36 = vector.broadcast %cst_20 : f32 to vector<64x128xf32>
    %37 = arith.maximumf %35, %36 : vector<64x128xf32>
    %38 = vector.extract_strided_slice %37 {offsets = [0, 0], sizes = [32, 128], strides = [1, 1]} : vector<64x128xf32> to vector<32x128xf32>
    %39 = vector.extract_strided_slice %37 {offsets = [32, 0], sizes = [32, 128], strides = [1, 1]} : vector<64x128xf32> to vector<32x128xf32>
    %40 = arith.mulf %38, %39 : vector<32x128xf32>
    %cst_21 = arith.constant dense<0.000000e+00> : vector<128xf32>
    %41 = vector.multi_reduction <add>, %40, %cst_21 [0] : vector<32x128xf32> to vector<128xf32>
    %42 = vector.shape_cast %41 : vector<128xf32> to vector<1x128xf32>
    %43 = vector.extract_strided_slice %21 {offsets = [0, 0], sizes = [32, 128], strides = [1, 1]} : vector<64x128xf32> to vector<32x128xf32>
    %44 = vector.extract_strided_slice %21 {offsets = [32, 0], sizes = [32, 128], strides = [1, 1]} : vector<64x128xf32> to vector<32x128xf32>
    %45 = arith.mulf %43, %44 : vector<32x128xf32>
    %cst_22 = arith.constant dense<0.000000e+00> : vector<128xf32>
    %46 = vector.multi_reduction <add>, %45, %cst_22 [0] : vector<32x128xf32> to vector<128xf32>
    %47 = vector.shape_cast %46 : vector<128xf32> to vector<1x128xf32>
    %48 = arith.addf %42, %47 : vector<1x128xf32>
    %c0_23 = arith.constant 0 : index
    %c0_24 = arith.constant 0 : index
    %49 = vector.load %arg9[%c0_23, %c0_24] : memref<1x128xf32, #tpu.memory_space<vmem>>, vector<1x128xf32>
    tpu.vector_store %arg9[%c0_23, %c0_24], %48 {strides = array<i32>} : memref<1x128xf32, #tpu.memory_space<vmem>>, vector<1x128xf32>,
    return
  }
  func.func @transform_0(%arg0: i32) -> (i32, i32) {
    %c0_i32 = arith.constant 0 : i32
    %c0_i32_0 = arith.constant 0 : i32
    return %c0_i32, %arg0 : i32, i32
  }
  func.func @transform_1(%arg0: i32) -> (i32, i32) {
    %c0_i32 = arith.constant 0 : i32
    %c0_i32_0 = arith.constant 0 : i32
    return %c0_i32, %arg0 : i32, i32
  }
  func.func @transform_2(%arg0: i32) -> (i32, i32) {
    %c0_i32 = arith.constant 0 : i32
    %c0_i32_0 = arith.constant 0 : i32
    %c0_i32_1 = arith.constant 0 : i32
    return %c0_i32, %c0_i32_0 : i32, i32
  }
  func.func @transform_3(%arg0: i32) -> (i32, i32) {
    %c0_i32 = arith.constant 0 : i32
    %c0_i32_0 = arith.constant 0 : i32
    %c0_i32_1 = arith.constant 0 : i32
    return %c0_i32, %c0_i32_0 : i32, i32
  }
  func.func @transform_4(%arg0: i32) -> (i32, i32) {
    %c0_i32 = arith.constant 0 : i32
    %c0_i32_0 = arith.constant 0 : i32
    %c0_i32_1 = arith.constant 0 : i32
    return %c0_i32, %c0_i32_0 : i32, i32
  }
  func.func @transform_5(%arg0: i32) -> (i32, i32) {
    %c0_i32 = arith.constant 0 : i32
    %c0_i32_0 = arith.constant 0 : i32
    %c0_i32_1 = arith.constant 0 : i32
    return %c0_i32, %c0_i32_0 : i32, i32
  }
  func.func @transform_6(%arg0: i32) -> (i32, i32) {
    %c0_i32 = arith.constant 0 : i32
    %c0_i32_0 = arith.constant 0 : i32
    %c0_i32_1 = arith.constant 0 : i32
    return %c0_i32, %c0_i32_0 : i32, i32
  }
  func.func @transform_7(%arg0: i32) -> (i32, i32) {
    %c0_i32 = arith.constant 0 : i32
    %c0_i32_0 = arith.constant 0 : i32
    %c0_i32_1 = arith.constant 0 : i32
    return %c0_i32, %c0_i32_0 : i32, i32
  }
  func.func @transform_8(%arg0: i32) -> (i32, i32) {
    %c0_i32 = arith.constant 0 : i32
    %c0_i32_0 = arith.constant 0 : i32
    return %c0_i32, %arg0 : i32, i32
  }
}

</mosaic_0001>

<llo_original>
// kernel: tpu_custom_call.1
$region0: #{tpu_custom_call.1}
  #allocation0 [shape = 'u32[]', space=smem, size = 0x4, offset = 0x4, fixed_abs, tag = 'smem constant byte address 0x4 - core index']
  #allocation1 [shape = 'u32[144,128]{1,0:T(1,128)}', space=vmem, size = 0x12000, scoped, tag = 'internal scratch']
  %s0 = inlined_call_operand.vmem [shape: s32[2,128], index: 0, kind: input, shape index: {}]
  %s1 = inlined_call_operand.vmem [shape: bf16[40,128], index: 1, kind: input, shape index: {}]
  %s2 = inlined_call_operand.vmem [shape: bf16[128,232], index: 2, kind: input, shape index: {}]
  %s3 = inlined_call_operand.vmem [shape: f32[128,1], index: 3, kind: input, shape index: {}]
  %s4 = inlined_call_operand.vmem [shape: bf16[64,64], index: 4, kind: input, shape index: {}]
  %s5 = inlined_call_operand.vmem [shape: f32[64,1], index: 5, kind: input, shape index: {}]
  %s6 = inlined_call_operand.vmem [shape: bf16[64,64], index: 6, kind: input, shape index: {}]
  %s7 = inlined_call_operand.vmem [shape: f32[64,1], index: 7, kind: input, shape index: {}]
  %s8 = inlined_call_operand.hbm [shape: f32[1,128], index: 8, kind: output, shape index: {}]
  %s9 = sld [smem:[#allocation0]]
  $region42: #{tpu_custom_call.1} parent=0
    _
  %s11 = ssub.s32 1, %s9
  %s12 = scalar_select 0, %s11, %s9
  $region1: #{tpu_custom_call.1} parent=0
    #allocation2 [shape = 'u8[512]{0}', space=vmem, size = 0x400, scoped, tag = 'output window, operand 0, single buffered']
    #allocation3 [shape = 's32[1]{0}', space=sflag, size = 0x4, scoped, tag = 'scoped memory for tpu_custom_call.1']
    %13 = vsyncpa [#allocation3], 0
    // Predicated region
    $region2: #{tpu_custom_call.1} parent=1 // pred_check
      _
    $region3: #{tpu_custom_call.1} parent=1 // pred_check_branch
      %15 = sbr.rel (0) target = $region5
    $region4: #{tpu_custom_call.1} parent=1 // pred_region
      _
    $region5: #{tpu_custom_call.1} parent=1 // pred_fallthru
      _
    // Predicated region
    $region6: #{tpu_custom_call.1} parent=1 // pred_check
      _
    $region7: #{tpu_custom_call.1} parent=1 // pred_check_branch
      %17 = sbr.rel (0) target = $region9
    $region8: #{tpu_custom_call.1} parent=1 // pred_region
      _
    $region9: #{tpu_custom_call.1} parent=1 // pred_fallthru
      _
    // Predicated region
    $region10: #{tpu_custom_call.1} parent=1 // pred_check
      _
    $region11: #{tpu_custom_call.1} parent=1 // pred_check_branch
      %19 = sbr.rel (0) target = $region13
    $region12: #{tpu_custom_call.1} parent=1 // pred_region
      _
    $region13: #{tpu_custom_call.1} parent=1 // pred_fallthru
      _
    // Predicated region
    $region14: #{tpu_custom_call.1} parent=1 // pred_check
      _
    $region15: #{tpu_custom_call.1} parent=1 // pred_check_branch
      %21 = sbr.rel (0) target = $region17
    $region16: #{tpu_custom_call.1} parent=1 // pred_region
      _
    $region17: #{tpu_custom_call.1} parent=1 // pred_fallthru
      _
    // Predicated region
    $region18: #{tpu_custom_call.1} parent=1 // pred_check
      _
    $region19: #{tpu_custom_call.1} parent=1 // pred_check_branch
      %23 = sbr.rel (0) target = $region21
    $region20: #{tpu_custom_call.1} parent=1 // pred_region
      _
    $region21: #{tpu_custom_call.1} parent=1 // pred_fallthru
      _
    // Predicated region
    $region22: #{tpu_custom_call.1} parent=1 // pred_check
      _
    $region23: #{tpu_custom_call.1} parent=1 // pred_check_branch
      %25 = sbr.rel (0) target = $region25
    $region24: #{tpu_custom_call.1} parent=1 // pred_region
      _
    $region25: #{tpu_custom_call.1} parent=1 // pred_fallthru
      _
    // Predicated region
    $region26: #{tpu_custom_call.1} parent=1 // pred_check
      _
    $region27: #{tpu_custom_call.1} parent=1 // pred_check_branch
      %27 = sbr.rel (0) target = $region29
    $region28: #{tpu_custom_call.1} parent=1 // pred_region
      _
    $region29: #{tpu_custom_call.1} parent=1 // pred_fallthru
      _
    // Predicated region
    $region30: #{tpu_custom_call.1} parent=1 // pred_check
      _
    $region31: #{tpu_custom_call.1} parent=1 // pred_check_branch
      %29 = sbr.rel (0) target = $region33
    $region32: #{tpu_custom_call.1} parent=1 // pred_region
      _
    $region33: #{tpu_custom_call.1} parent=1 // pred_fallthru
      _
    %v31 = vlaneseq
    %v32 = vshrl.u32 %v31, 7
    %v33 = vadd.s32 %v32, 8
    %v34 = vadd.s32 %v32, 16
    %v35 = vadd.s32 %v32, 24
    %v36 = vadd.s32 %v32, 32
    %v37 = vadd.s32 %v32, 40
    %v38 = vadd.s32 %v32, 48
    %v39 = vadd.s32 %v32, 56
    %v40 = vadd.s32 %v32, 64
    %v41 = vadd.s32 %v32, 72
    %v42 = vadd.s32 %v32, 80
    %v43 = vadd.s32 %v32, 88
    %v44 = vadd.s32 %v32, 96
    %v45 = vadd.s32 %v32, 104
    %v46 = vadd.s32 %v32, 112
    %v47 = vadd.s32 %v32, 120
    %v48 = vadd.s32 %v32, 128
    %v49 = vadd.s32 %v32, 136
    %v50 = vadd.s32 %v32, 144
    %v51 = vadd.s32 %v32, 152
    %v52 = vadd.s32 %v32, 160
    %v53 = vadd.s32 %v32, 168
    %v54 = vadd.s32 %v32, 176
    %v55 = vadd.s32 %v32, 184
    %v56 = vld [vmem:[%s0] sm:$0x1]
    %v57 = vld [vmem:[%s0 + $0x1] sm:$0x1]
    %v58 = vlaneseq
    %v59 = vshrl.u32 %v58, 7
    %v60 = vsub.s32 0, %v59
    %v61 = vrot.slane %v56, %v60
    %vm62 = vcmp.eq.s32.totalorder %v32, %v61
    %vm63 = vcmp.eq.s32.totalorder %v33, %v61
    %vm64 = vcmp.eq.s32.totalorder %v34, %v61
    %vm65 = vcmp.eq.s32.totalorder %v35, %v61
    %vm66 = vcmp.eq.s32.totalorder %v36, %v61
    %vm67 = vcmp.eq.s32.totalorder %v37, %v61
    %vm68 = vcmp.eq.s32.totalorder %v38, %v61
    %vm69 = vcmp.eq.s32.totalorder %v39, %v61
    %vm70 = vcmp.eq.s32.totalorder %v40, %v61
    %vm71 = vcmp.eq.s32.totalorder %v41, %v61
    %vm72 = vcmp.eq.s32.totalorder %v42, %v61
    %vm73 = vcmp.eq.s32.totalorder %v43, %v61
    %vm74 = vcmp.eq.s32.totalorder %v44, %v61
    %vm75 = vcmp.eq.s32.totalorder %v45, %v61
    %vm76 = vcmp.eq.s32.totalorder %v46, %v61
    %vm77 = vcmp.eq.s32.totalorder %v47, %v61
    %vm78 = vcmp.eq.s32.totalorder %v48, %v61
    %vm79 = vcmp.eq.s32.totalorder %v49, %v61
    %vm80 = vcmp.eq.s32.totalorder %v50, %v61
    %vm81 = vcmp.eq.s32.totalorder %v51, %v61
    %vm82 = vcmp.eq.s32.totalorder %v52, %v61
    %vm83 = vcmp.eq.s32.totalorder %v53, %v61
    %vm84 = vcmp.eq.s32.totalorder %v54, %v61
    %vm85 = vcmp.eq.s32.totalorder %v55, %v61
    %v86 = vlaneseq
    %v87 = vshrl.u32 %v86, 7
    %v88 = vsub.s32 0, %v87
    %v89 = vrot.slane %v57, %v88
    %vm90 = vcmp.eq.s32.totalorder %v32, %v89
    %vm91 = vcmp.eq.s32.totalorder %v33, %v89
    %vm92 = vcmp.eq.s32.totalorder %v34, %v89
    %vm93 = vcmp.eq.s32.totalorder %v35, %v89
    %vm94 = vcmp.eq.s32.totalorder %v36, %v89
    %vm95 = vcmp.eq.s32.totalorder %v37, %v89
    %vm96 = vcmp.eq.s32.totalorder %v38, %v89
    %vm97 = vcmp.eq.s32.totalorder %v39, %v89
    %vm98 = vcmp.eq.s32.totalorder %v40, %v89
    %vm99 = vcmp.eq.s32.totalorder %v41, %v89
    %vm100 = vcmp.eq.s32.totalorder %v42, %v89
    %vm101 = vcmp.eq.s32.totalorder %v43, %v89
    %vm102 = vcmp.eq.s32.totalorder %v44, %v89
    %vm103 = vcmp.eq.s32.totalorder %v45, %v89
    %vm104 = vcmp.eq.s32.totalorder %v46, %v89
    %vm105 = vcmp.eq.s32.totalorder %v47, %v89
    %vm106 = vcmp.eq.s32.totalorder %v48, %v89
    %vm107 = vcmp.eq.s32.totalorder %v49, %v89
    %vm108 = vcmp.eq.s32.totalorder %v50, %v89
    %vm109 = vcmp.eq.s32.totalorder %v51, %v89
    %vm110 = vcmp.eq.s32.totalorder %v52, %v89
    %vm111 = vcmp.eq.s32.totalorder %v53, %v89
    %vm112 = vcmp.eq.s32.totalorder %v54, %v89
    %vm113 = vcmp.eq.s32.totalorder %v55, %v89
    %vm114 = vmor %vm62, %vm90
    %vm115 = vmor %vm63, %vm91
    %vm116 = vmor %vm64, %vm92
    %vm117 = vmor %vm65, %vm93
    %vm118 = vmor %vm66, %vm94
    %vm119 = vmor %vm67, %vm95
    %vm120 = vmor %vm68, %vm96
    %vm121 = vmor %vm69, %vm97
    %vm122 = vmor %vm70, %vm98
    %vm123 = vmor %vm71, %vm99
    %vm124 = vmor %vm72, %vm100
    %vm125 = vmor %vm73, %vm101
    %vm126 = vmor %vm74, %vm102
    %vm127 = vmor %vm75, %vm103
    %vm128 = vmor %vm76, %vm104
    %vm129 = vmor %vm77, %vm105
    %vm130 = vmor %vm78, %vm106
    %vm131 = vmor %vm79, %vm107
    %vm132 = vmor %vm80, %vm108
    %vm133 = vmor %vm81, %vm109
    %vm134 = vmor %vm82, %vm110
    %vm135 = vmor %vm83, %vm111
    %vm136 = vmor %vm84, %vm112
    %vm137 = vmor %vm85, %vm113
    %v138 = vsel %vm114, 1, 0
    %v139 = vsel %vm115, 1, 0
    %v140 = vsel %vm116, 1, 0
    %v141 = vsel %vm117, 1, 0
    %v142 = vsel %vm118, 1, 0
    %v143 = vsel %vm119, 1, 0
    %v144 = vsel %vm120, 1, 0
    %v145 = vsel %vm121, 1, 0
    %v146 = vsel %vm122, 1, 0
    %v147 = vsel %vm123, 1, 0
    %v148 = vsel %vm124, 1, 0
    %v149 = vsel %vm125, 1, 0
    %v150 = vsel %vm126, 1, 0
    %v151 = vsel %vm127, 1, 0
    %v152 = vsel %vm128, 1, 0
    %v153 = vsel %vm129, 1, 0
    %v154 = vsel %vm130, 1, 0
    %v155 = vsel %vm131, 1, 0
    %v156 = vsel %vm132, 1, 0
    %v157 = vsel %vm133, 1, 0
    %v158 = vsel %vm134, 1, 0
    %v159 = vsel %vm135, 1, 0
    %v160 = vsel %vm136, 1, 0
    %v161 = vsel %vm137, 1, 0
    %v162 = vcvt.s32.f32 %v138
    %v163 = vcvt.s32.f32 %v139
    %v164 = vcvt.s32.f32 %v140
    %v165 = vcvt.s32.f32 %v141
    %v166 = vcvt.s32.f32 %v142
    %v167 = vcvt.s32.f32 %v143
    %v168 = vcvt.s32.f32 %v144
    %v169 = vcvt.s32.f32 %v145
    %v170 = vcvt.s32.f32 %v146
    %v171 = vcvt.s32.f32 %v147
    %v172 = vcvt.s32.f32 %v148
    %v173 = vcvt.s32.f32 %v149
    %v174 = vcvt.s32.f32 %v150
    %v175 = vcvt.s32.f32 %v151
    %v176 = vcvt.s32.f32 %v152
    %v177 = vcvt.s32.f32 %v153
    %v178 = vcvt.s32.f32 %v154
    %v179 = vcvt.s32.f32 %v155
    %v180 = vcvt.s32.f32 %v156
    %v181 = vcvt.s32.f32 %v157
    %v182 = vcvt.s32.f32 %v158
    %v183 = vcvt.s32.f32 %v159
    %v184 = vcvt.s32.f32 %v160
    %v185 = vcvt.s32.f32 %v161
    %v186 = vpack.c.bf16 %v163, %v162
    %v187 = vpack.c.bf16 %v165, %v164
    %v188 = vpack.c.bf16 %v167, %v166
    %v189 = vpack.c.bf16 %v169, %v168
    %v190 = vpack.c.bf16 %v171, %v170
    %v191 = vpack.c.bf16 %v173, %v172
    %v192 = vpack.c.bf16 %v175, %v174
    %v193 = vpack.c.bf16 %v177, %v176
    %v194 = vpack.c.bf16 %v179, %v178
    %v195 = vpack.c.bf16 %v181, %v180
    %v196 = vpack.c.bf16 %v183, %v182
    %v197 = vpack.c.bf16 %v185, %v184
    %v198 = vld [vmem:[%s1] sm:$0xf]
    %v199 = vld [vmem:[%s1 + $0x4] sm:$0xf]
    %v200 = vld [vmem:[%s1 + $0x8] sm:$0xf]
    %v201 = vld [vmem:[%s1 + $0xc] sm:$0xf]
    %v202 = vld [vmem:[%s1 + $0x10] sm:$0xf]
    %v208 = vunpack.c.l.b16 %v198
    %v209 = vunpack.c.l.b16 %v199
    %v210 = vunpack.c.l.b16 %v200
    %v211 = vunpack.c.l.b16 %v201
    %v212 = vunpack.c.l.b16 %v202
    %v213 = vpack.c.b16 %v209, %v208
    %v214 = vpack.c.b16 %v211, %v210
    %v215 = vpack.c.b16 %v212, %v212
    %v218 = vld [vmem:[%s2] sm:$0xff]
    %v219 = vld [vmem:[%s2 + $0x8] sm:$0xff]
    %v220 = vld [vmem:[%s2 + $0x10] sm:$0xff]
    %v221 = vld [vmem:[%s2 + $0x18] sm:$0xff]
    %v222 = vld [vmem:[%s2 + $0x20] sm:$0xff]
    %v223 = vld [vmem:[%s2 + $0x28] sm:$0xff]
    %v224 = vld [vmem:[%s2 + $0x30] sm:$0xff]
    %v225 = vld [vmem:[%s2 + $0x38] sm:$0xff]
    %v226 = vld [vmem:[%s2 + $0x40] sm:$0xff]
    %v227 = vld [vmem:[%s2 + $0x48] sm:$0xff]
    %v228 = vld [vmem:[%s2 + $0x50] sm:$0xff]
    %v229 = vld [vmem:[%s2 + $0x58] sm:$0xff]
    %v230 = vld [vmem:[%s2 + $0x60] sm:$0xff]
    %v231 = vld [vmem:[%s2 + $0x68] sm:$0xff]
    %v232 = vld [vmem:[%s2 + $0x70] sm:$0xff]
    %v233 = vld [vmem:[%s2 + $0x78] sm:$0xff]
    %v234 = vld [vmem:[%s3] sm:$0xff]
    %v235 = vld [vmem:[%s3 + $0x8] sm:$0xff]
    %v236 = vld [vmem:[%s3 + $0x10] sm:$0xff]
    %v237 = vld [vmem:[%s3 + $0x18] sm:$0xff]
    %v238 = vld [vmem:[%s3 + $0x20] sm:$0xff]
    %v239 = vld [vmem:[%s3 + $0x28] sm:$0xff]
    %v240 = vld [vmem:[%s3 + $0x30] sm:$0xff]
    %v241 = vld [vmem:[%s3 + $0x38] sm:$0xff]
    %v242 = vld [vmem:[%s3 + $0x40] sm:$0xff]
    %v243 = vld [vmem:[%s3 + $0x48] sm:$0xff]
    %v244 = vld [vmem:[%s3 + $0x50] sm:$0xff]
    %v245 = vld [vmem:[%s3 + $0x58] sm:$0xff]
    %v246 = vld [vmem:[%s3 + $0x60] sm:$0xff]
    %v247 = vld [vmem:[%s3 + $0x68] sm:$0xff]
    %v248 = vld [vmem:[%s3 + $0x70] sm:$0xff]
    %v249 = vld [vmem:[%s3 + $0x78] sm:$0xff]
    %251 = vset.pattern.permute.xlu0 0
    %252 = vperm.xlu0 %251, %v234
    %v253 = vpop.permute.xlu0 %252
    %256 = vset.pattern.permute.xlu0 0
    %257 = vperm.xlu0 %256, %v235
    %v258 = vpop.permute.xlu0 %257
    %261 = vset.pattern.permute.xlu0 0
    %262 = vperm.xlu0 %261, %v236
    %v263 = vpop.permute.xlu0 %262
    %266 = vset.pattern.permute.xlu0 0
    %267 = vperm.xlu0 %266, %v237
    %v268 = vpop.permute.xlu0 %267
    %271 = vset.pattern.permute.xlu0 0
    %272 = vperm.xlu0 %271, %v238
    %v273 = vpop.permute.xlu0 %272
    %276 = vset.pattern.permute.xlu0 0
    %277 = vperm.xlu0 %276, %v239
    %v278 = vpop.permute.xlu0 %277
    %281 = vset.pattern.permute.xlu0 0
    %282 = vperm.xlu0 %281, %v240
    %v283 = vpop.permute.xlu0 %282
    %286 = vset.pattern.permute.xlu0 0
    %287 = vperm.xlu0 %286, %v241
    %v288 = vpop.permute.xlu0 %287
    %291 = vset.pattern.permute.xlu0 0
    %292 = vperm.xlu0 %291, %v242
    %v293 = vpop.permute.xlu0 %292
    %296 = vset.pattern.permute.xlu0 0
    %297 = vperm.xlu0 %296, %v243
    %v298 = vpop.permute.xlu0 %297
    %301 = vset.pattern.permute.xlu0 0
    %302 = vperm.xlu0 %301, %v244
    %v303 = vpop.permute.xlu0 %302
    %306 = vset.pattern.permute.xlu0 0
    %307 = vperm.xlu0 %306, %v245
    %v308 = vpop.permute.xlu0 %307
    %311 = vset.pattern.permute.xlu0 0
    %312 = vperm.xlu0 %311, %v246
    %v313 = vpop.permute.xlu0 %312
    %316 = vset.pattern.permute.xlu0 0
    %317 = vperm.xlu0 %316, %v247
    %v318 = vpop.permute.xlu0 %317
    %321 = vset.pattern.permute.xlu0 0
    %322 = vperm.xlu0 %321, %v248
    %v323 = vpop.permute.xlu0 %322
    %326 = vset.pattern.permute.xlu0 0
    %327 = vperm.xlu0 %326, %v249
    %v328 = vpop.permute.xlu0 %327
    %v346 = vunpack.c.l.b16 %v218
    %v347 = vunpack.c.h.b16 %v218
    %v348 = vunpack.c.l.b16 %v219
    %v349 = vunpack.c.h.b16 %v219
    %v350 = vunpack.c.l.b16 %v220
    %v351 = vunpack.c.h.b16 %v220
    %v352 = vunpack.c.l.b16 %v221
    %v353 = vunpack.c.h.b16 %v221
    %v354 = vunpack.c.l.b16 %v222
    %v355 = vunpack.c.h.b16 %v222
    %v356 = vunpack.c.l.b16 %v223
    %v357 = vunpack.c.h.b16 %v223
    %v358 = vunpack.c.l.b16 %v224
    %v359 = vunpack.c.h.b16 %v224
    %v360 = vunpack.c.l.b16 %v225
    %v361 = vunpack.c.h.b16 %v225
    %v362 = vunpack.c.l.b16 %v226
    %v363 = vunpack.c.h.b16 %v226
    %v364 = vunpack.c.l.b16 %v227
    %v365 = vunpack.c.h.b16 %v227
    %v366 = vunpack.c.l.b16 %v228
    %v367 = vunpack.c.h.b16 %v228
    %v368 = vunpack.c.l.b16 %v229
    %v369 = vunpack.c.h.b16 %v229
    %v370 = vunpack.c.l.b16 %v230
    %v371 = vunpack.c.h.b16 %v230
    %v372 = vunpack.c.l.b16 %v231
    %v373 = vunpack.c.h.b16 %v231
    %v374 = vunpack.c.l.b16 %v232
    %v375 = vunpack.c.h.b16 %v232
    %v376 = vunpack.c.l.b16 %v233
    %v377 = vunpack.c.h.b16 %v233
    %v378 = vpack.c.b16 %v348, %v346
    %v379 = vpack.c.b16 %v349, %v347
    %v380 = vpack.c.b16 %v352, %v350
    %v381 = vpack.c.b16 %v353, %v351
    %v382 = vpack.c.b16 %v356, %v354
    %v383 = vpack.c.b16 %v357, %v355
    %v384 = vpack.c.b16 %v360, %v358
    %v385 = vpack.c.b16 %v361, %v359
    %v386 = vpack.c.b16 %v364, %v362
    %v387 = vpack.c.b16 %v365, %v363
    %v388 = vpack.c.b16 %v368, %v366
    %v389 = vpack.c.b16 %v369, %v367
    %v390 = vpack.c.b16 %v372, %v370
    %v391 = vpack.c.b16 %v373, %v371
    %v392 = vpack.c.b16 %v376, %v374
    %v393 = vpack.c.b16 %v377, %v375
    %vm402 = vcmask 850944
    %v404 = vsel %vm402, %v379, 0
    %v407 = vsel %vm402, %v381, 0
    %v410 = vsel %vm402, %v383, 0
    %v413 = vsel %vm402, %v385, 0
    %v416 = vsel %vm402, %v387, 0
    %v419 = vsel %vm402, %v389, 0
    %v422 = vsel %vm402, %v391, 0
    %v425 = vsel %vm402, %v393, 0
    %vm427 = vcmask 1043456
    %v429 = vsel %vm427, %v215, 0
    %431 = vmatprep.subr.bf16.mxu0 0
    %432 = vmatpush1.bf16.msra.mxu0 %v186
    %433 = vmatprep.subr.bf16.mxu0 0
    %434 = vmatpush1.bf16.msra.mxu0 %v187
    %435 = vmatprep.subr.bf16.mxu0 0
    %436 = vmatpush1.bf16.msra.mxu0 %v188
    %437 = vmatprep.subr.bf16.mxu0 0
    %438 = vmatpush1.bf16.msra.mxu0 %v189
    %439 = vmatprep.subr.bf16.mxu0 0
    %440 = vmatpush1.bf16.msra.mxu0 %v190
    %441 = vmatprep.subr.bf16.mxu0 0
    %442 = vmatpush1.bf16.msra.mxu0 %v191
    %443 = vmatprep.subr.bf16.mxu0 0
    %444 = vmatpush1.bf16.msra.mxu0 %v192
    %445 = vmatprep.subr.bf16.mxu0 0
    %446 = vmatpush1.bf16.msra.mxu0 %v193
    %447 = vmatprep.subr.bf16.mxu0 0
    %448 = vmatpush1.bf16.msra.mxu0 %v194
    %449 = vmatprep.subr.bf16.mxu0 0
    %450 = vmatpush1.bf16.msra.mxu0 %v195
    %451 = vmatprep.subr.bf16.mxu0 0
    %452 = vmatpush1.bf16.msra.mxu0 %v196
    %453 = vmatprep.subr.bf16.mxu0 0
    %454 = vmatpush1.bf16.msra.mxu0 %v197
    %455 = vmatprep.subr.bf16.mxu0 0
    %456 = vmatpush1.bf16.msra.mxu0 %v213
    %457 = vmatprep.subr.bf16.mxu0 0
    %458 = vmatpush1.bf16.msra.mxu0 %v214
    %459 = vmatprep.subr.bf16.mxu0 0
    %460 = vmatpush1.bf16.msra.mxu0 %v429
    %461 = vmatprep.subr.bf16.mxu0 0
    %462 = vmatpush1.bf16.msra.mxu0 0
    %463 = vmatprep.mubr.bf16.mxu0 %v404
    %464 = vmatmul.mubr.bf16.gmra.mrb[0].mxu0 %v378
    %v465 = vpop.f32.mrb[0].mxu0
    %v466 = vadd.f32 %v253, %v465
    %v467 = vpop.f32.mrb[0].mxu0
    %v468 = vpop.f32.mrb[0].mxu0
    %v469 = vadd.f32 %v258, %v468
    %v470 = vpop.f32.mrb[0].mxu0
    %471 = vmatprep.mubr.bf16.mxu0 %v407
    %472 = vmatmul.mubr.bf16.gmra.mrb[0].mxu0 %v380
    %v473 = vpop.f32.mrb[0].mxu0
    %v474 = vadd.f32 %v263, %v473
    %v475 = vpop.f32.mrb[0].mxu0
    %v476 = vpop.f32.mrb[0].mxu0
    %v477 = vadd.f32 %v268, %v476
    %v478 = vpop.f32.mrb[0].mxu0
    %479 = vmatprep.mubr.bf16.mxu0 %v410
    %480 = vmatmul.mubr.bf16.gmra.mrb[0].mxu0 %v382
    %v481 = vpop.f32.mrb[0].mxu0
    %v482 = vadd.f32 %v273, %v481
    %v483 = vpop.f32.mrb[0].mxu0
    %v484 = vpop.f32.mrb[0].mxu0
    %v485 = vadd.f32 %v278, %v484
    %v486 = vpop.f32.mrb[0].mxu0
    %487 = vmatprep.mubr.bf16.mxu0 %v413
    %488 = vmatmul.mubr.bf16.gmra.mrb[0].mxu0 %v384
    %v489 = vpop.f32.mrb[0].mxu0
    %v490 = vadd.f32 %v283, %v489
    %v491 = vpop.f32.mrb[0].mxu0
    %v492 = vpop.f32.mrb[0].mxu0
    %v493 = vadd.f32 %v288, %v492
    %v494 = vpop.f32.mrb[0].mxu0
    %495 = vmatprep.mubr.bf16.mxu0 %v416
    %496 = vmatmul.mubr.bf16.gmra.mrb[0].mxu0 %v386
    %v497 = vpop.f32.mrb[0].mxu0
    %v498 = vadd.f32 %v293, %v497
    %v499 = vpop.f32.mrb[0].mxu0
    %v500 = vpop.f32.mrb[0].mxu0
    %v501 = vadd.f32 %v298, %v500
    %v502 = vpop.f32.mrb[0].mxu0
    %503 = vmatprep.mubr.bf16.mxu0 %v419
    %504 = vmatmul.mubr.bf16.gmra.mrb[0].mxu0 %v388
    %v505 = vpop.f32.mrb[0].mxu0
    %v506 = vadd.f32 %v303, %v505
    %v507 = vpop.f32.mrb[0].mxu0
    %v508 = vpop.f32.mrb[0].mxu0
    %v509 = vadd.f32 %v308, %v508
    %v510 = vpop.f32.mrb[0].mxu0
    %511 = vmatprep.mubr.bf16.mxu0 %v422
    %512 = vmatmul.mubr.bf16.gmra.mrb[0].mxu0 %v390
    %v513 = vpop.f32.mrb[0].mxu0
    %v514 = vadd.f32 %v313, %v513
    %v515 = vpop.f32.mrb[0].mxu0
    %v516 = vpop.f32.mrb[0].mxu0
    %v517 = vadd.f32 %v318, %v516
    %v518 = vpop.f32.mrb[0].mxu0
    %519 = vmatprep.mubr.bf16.mxu0 %v425
    %520 = vmatmul.mubr.bf16.gmra.mrb[0].mxu0 %v392
    %v521 = vpop.f32.mrb[0].mxu0
    %v522 = vadd.f32 %v323, %v521
    %v523 = vpop.f32.mrb[0].mxu0
    %v524 = vpop.f32.mrb[0].mxu0
    %v525 = vadd.f32 %v328, %v524
    %v526 = vpop.f32.mrb[0].mxu0
    %527 = vdwg.mxu0
    %v528 = vmax.f32 %v466, 0.0
    %v529 = vmax.f32 %v469, 0.0
    %v530 = vmax.f32 %v474, 0.0
    %v531 = vmax.f32 %v477, 0.0
    %v532 = vmax.f32 %v482, 0.0
    %v533 = vmax.f32 %v485, 0.0
    %v534 = vmax.f32 %v490, 0.0
    %v535 = vmax.f32 %v493, 0.0
    %v536 = vmax.f32 %v498, 0.0
    %v537 = vmax.f32 %v501, 0.0
    %v538 = vmax.f32 %v506, 0.0
    %v539 = vmax.f32 %v509, 0.0
    %v540 = vmax.f32 %v514, 0.0
    %v541 = vmax.f32 %v517, 0.0
    %v542 = vmax.f32 %v522, 0.0
    %v543 = vmax.f32 %v525, 0.0
    %v544 = vld [vmem:[%s4] sm:$0xf]
    %v545 = vld [vmem:[%s4 + $0x4] sm:$0xf]
    %v546 = vld [vmem:[%s4 + $0x8] sm:$0xf]
    %v547 = vld [vmem:[%s4 + $0xc] sm:$0xf]
    %v548 = vld [vmem:[%s4 + $0x10] sm:$0xf]
    %v549 = vld [vmem:[%s4 + $0x14] sm:$0xf]
    %v550 = vld [vmem:[%s4 + $0x18] sm:$0xf]
    %v551 = vld [vmem:[%s4 + $0x1c] sm:$0xf]
    %v552 = vpack.c.bf16 %v529, %v528
    %v553 = vpack.c.bf16 %v531, %v530
    %v554 = vpack.c.bf16 %v533, %v532
    %v555 = vpack.c.bf16 %v535, %v534
    %v556 = vld [vmem:[%s5] sm:$0xff]
    %v557 = vld [vmem:[%s5 + $0x8] sm:$0xff]
    %v558 = vld [vmem:[%s5 + $0x10] sm:$0xff]
    %v559 = vld [vmem:[%s5 + $0x18] sm:$0xff]
    %v560 = vld [vmem:[%s5 + $0x20] sm:$0xff]
    %v561 = vld [vmem:[%s5 + $0x28] sm:$0xff]
    %v562 = vld [vmem:[%s5 + $0x30] sm:$0xff]
    %v563 = vld [vmem:[%s5 + $0x38] sm:$0xff]
    %565 = vset.pattern.permute.xlu0 0
    %566 = vperm.xlu0 %565, %v556
    %v567 = vpop.permute.xlu0 %566
    %570 = vset.pattern.permute.xlu0 0
    %571 = vperm.xlu0 %570, %v557
    %v572 = vpop.permute.xlu0 %571
    %575 = vset.pattern.permute.xlu0 0
    %576 = vperm.xlu0 %575, %v558
    %v577 = vpop.permute.xlu0 %576
    %580 = vset.pattern.permute.xlu0 0
    %581 = vperm.xlu0 %580, %v559
    %v582 = vpop.permute.xlu0 %581
    %585 = vset.pattern.permute.xlu0 0
    %586 = vperm.xlu0 %585, %v560
    %v587 = vpop.permute.xlu0 %586
    %590 = vset.pattern.permute.xlu0 0
    %591 = vperm.xlu0 %590, %v561
    %v592 = vpop.permute.xlu0 %591
    %595 = vset.pattern.permute.xlu0 0
    %596 = vperm.xlu0 %595, %v562
    %v597 = vpop.permute.xlu0 %596
    %600 = vset.pattern.permute.xlu0 0
    %601 = vperm.xlu0 %600, %v563
    %v602 = vpop.permute.xlu0 %601
    %v612 = vunpack.c.l.b16 %v544
    %v613 = vunpack.c.l.b16 %v545
    %v614 = vunpack.c.l.b16 %v546
    %v615 = vunpack.c.l.b16 %v547
    %v616 = vunpack.c.l.b16 %v548
    %v617 = vunpack.c.l.b16 %v549
    %v618 = vunpack.c.l.b16 %v550
    %v619 = vunpack.c.l.b16 %v551
    %v620 = vpack.c.b16 %v613, %v612
    %v621 = vpack.c.b16 %v615, %v614
    %v622 = vpack.c.b16 %v617, %v616
    %v623 = vpack.c.b16 %v619, %v618
    %vm624 = vcmask 523264
    %v626 = vsel %vm624, %v620, 0
    %v629 = vsel %vm624, %v621, 0
    %v632 = vsel %vm624, %v622, 0
    %v635 = vsel %vm624, %v623, 0
    %637 = vmatprep.subr.bf16.mxu0 0
    %638 = vmatpush1.bf16.msra.mxu0 %v552
    %639 = vmatprep.subr.bf16.mxu0 0
    %640 = vmatpush1.bf16.msra.mxu0 %v553
    %641 = vmatprep.subr.bf16.mxu0 0
    %642 = vmatpush1.bf16.msra.mxu0 %v554
    %643 = vmatprep.subr.bf16.mxu0 0
    %644 = vmatpush1.bf16.msra.mxu0 %v555
    %645 = vmatprep.subr.bf16.mxu0 0
    %646 = vmatpush1.bf16.msra.mxu0 0
    %647 = vmatprep.subr.bf16.mxu0 0
    %648 = vmatpush1.bf16.msra.mxu0 0
    %649 = vmatprep.subr.bf16.mxu0 0
    %650 = vmatpush1.bf16.msra.mxu0 0
    %651 = vmatprep.subr.bf16.mxu0 0
    %652 = vmatpush1.bf16.msra.mxu0 0
    %653 = vmatprep.subr.bf16.mxu0 0
    %654 = vmatpush1.bf16.msra.mxu0 0
    %655 = vmatprep.subr.bf16.mxu0 0
    %656 = vmatpush1.bf16.msra.mxu0 0
    %657 = vmatprep.subr.bf16.mxu0 0
    %658 = vmatpush1.bf16.msra.mxu0 0
    %659 = vmatprep.subr.bf16.mxu0 0
    %660 = vmatpush1.bf16.msra.mxu0 0
    %661 = vmatprep.subr.bf16.mxu0 0
    %662 = vmatpush1.bf16.msra.mxu0 0
    %663 = vmatprep.subr.bf16.mxu0 0
    %664 = vmatpush1.bf16.msra.mxu0 0
    %665 = vmatprep.subr.bf16.mxu0 0
    %666 = vmatpush1.bf16.msra.mxu0 0
    %667 = vmatprep.subr.bf16.mxu0 0
    %668 = vmatpush1.bf16.msra.mxu0 0
    %669 = vmatprep.mubr.bf16.mxu0 0
    %670 = vmatmul.mubr.bf16.gmra.mrb[0].mxu0 %v626
    %v671 = vpop.f32.mrb[0].mxu0
    %v672 = vadd.f32 %v567, %v671
    %v673 = vpop.f32.mrb[0].mxu0
    %v674 = vpop.f32.mrb[0].mxu0
    %v675 = vadd.f32 %v572, %v674
    %v676 = vpop.f32.mrb[0].mxu0
    %677 = vmatprep.mubr.bf16.mxu0 0
    %678 = vmatmul.mubr.bf16.gmra.mrb[0].mxu0 %v629
    %v679 = vpop.f32.mrb[0].mxu0
    %v680 = vadd.f32 %v577, %v679
    %v681 = vpop.f32.mrb[0].mxu0
    %v682 = vpop.f32.mrb[0].mxu0
    %v683 = vadd.f32 %v582, %v682
    %v684 = vpop.f32.mrb[0].mxu0
    %685 = vmatprep.mubr.bf16.mxu0 0
    %686 = vmatmul.mubr.bf16.gmra.mrb[0].mxu0 %v632
    %v687 = vpop.f32.mrb[0].mxu0
    %v688 = vadd.f32 %v587, %v687
    %v689 = vpop.f32.mrb[0].mxu0
    %v690 = vpop.f32.mrb[0].mxu0
    %v691 = vadd.f32 %v592, %v690
    %v692 = vpop.f32.mrb[0].mxu0
    %693 = vmatprep.mubr.bf16.mxu0 0
    %694 = vmatmul.mubr.bf16.gmra.mrb[0].mxu0 %v635
    %v695 = vpop.f32.mrb[0].mxu0
    %v696 = vadd.f32 %v597, %v695
    %v697 = vpop.f32.mrb[0].mxu0
    %v698 = vpop.f32.mrb[0].mxu0
    %v699 = vadd.f32 %v602, %v698
    %v700 = vpop.f32.mrb[0].mxu0
    %701 = vdwg.mxu0
    %v702 = vmax.f32 %v672, 0.0
    %v703 = vmax.f32 %v675, 0.0
    %v704 = vmax.f32 %v680, 0.0
    %v705 = vmax.f32 %v683, 0.0
    %v706 = vmax.f32 %v688, 0.0
    %v707 = vmax.f32 %v691, 0.0
    %v708 = vmax.f32 %v696, 0.0
    %v709 = vmax.f32 %v699, 0.0
    %v710 = vld [vmem:[%s6] sm:$0xf]
    %v711 = vld [vmem:[%s6 + $0x4] sm:$0xf]
    %v712 = vld [vmem:[%s6 + $0x8] sm:$0xf]
    %v713 = vld [vmem:[%s6 + $0xc] sm:$0xf]
    %v714 = vld [vmem:[%s6 + $0x10] sm:$0xf]
    %v715 = vld [vmem:[%s6 + $0x14] sm:$0xf]
    %v716 = vld [vmem:[%s6 + $0x18] sm:$0xf]
    %v717 = vld [vmem:[%s6 + $0x1c] sm:$0xf]
    %v718 = vpack.c.bf16 %v703, %v702
    %v719 = vpack.c.bf16 %v705, %v704
    %v720 = vpack.c.bf16 %v707, %v706
    %v721 = vpack.c.bf16 %v709, %v708
    %v722 = vld [vmem:[%s7] sm:$0xff]
    %v723 = vld [vmem:[%s7 + $0x8] sm:$0xff]
    %v724 = vld [vmem:[%s7 + $0x10] sm:$0xff]
    %v725 = vld [vmem:[%s7 + $0x18] sm:$0xff]
    %v726 = vld [vmem:[%s7 + $0x20] sm:$0xff]
    %v727 = vld [vmem:[%s7 + $0x28] sm:$0xff]
    %v728 = vld [vmem:[%s7 + $0x30] sm:$0xff]
    %v729 = vld [vmem:[%s7 + $0x38] sm:$0xff]
    %731 = vset.pattern.permute.xlu0 0
    %732 = vperm.xlu0 %731, %v722
    %v733 = vpop.permute.xlu0 %732
    %736 = vset.pattern.permute.xlu0 0
    %737 = vperm.xlu0 %736, %v723
    %v738 = vpop.permute.xlu0 %737
    %741 = vset.pattern.permute.xlu0 0
    %742 = vperm.xlu0 %741, %v724
    %v743 = vpop.permute.xlu0 %742
    %746 = vset.pattern.permute.xlu0 0
    %747 = vperm.xlu0 %746, %v725
    %v748 = vpop.permute.xlu0 %747
    %751 = vset.pattern.permute.xlu0 0
    %752 = vperm.xlu0 %751, %v726
    %v753 = vpop.permute.xlu0 %752
    %756 = vset.pattern.permute.xlu0 0
    %757 = vperm.xlu0 %756, %v727
    %v758 = vpop.permute.xlu0 %757
    %761 = vset.pattern.permute.xlu0 0
    %762 = vperm.xlu0 %761, %v728
    %v763 = vpop.permute.xlu0 %762
    %766 = vset.pattern.permute.xlu0 0
    %767 = vperm.xlu0 %766, %v729
    %v768 = vpop.permute.xlu0 %767
    %v778 = vunpack.c.l.b16 %v710
    %v779 = vunpack.c.l.b16 %v711
    %v780 = vunpack.c.l.b16 %v712
    %v781 = vunpack.c.l.b16 %v713
    %v782 = vunpack.c.l.b16 %v714
    %v783 = vunpack.c.l.b16 %v715
    %v784 = vunpack.c.l.b16 %v716
    %v785 = vunpack.c.l.b16 %v717
    %v786 = vpack.c.b16 %v779, %v778
    %v787 = vpack.c.b16 %v781, %v780
    %v788 = vpack.c.b16 %v783, %v782
    %v789 = vpack.c.b16 %v785, %v784
    %v791 = vsel %vm624, %v786, 0
    %v794 = vsel %vm624, %v787, 0
    %v797 = vsel %vm624, %v788, 0
    %v800 = vsel %vm624, %v789, 0
    %802 = vmatprep.subr.bf16.mxu0 0
    %803 = vmatpush1.bf16.msra.mxu0 %v718
    %804 = vmatprep.subr.bf16.mxu0 0
    %805 = vmatpush1.bf16.msra.mxu0 %v719
    %806 = vmatprep.subr.bf16.mxu0 0
    %807 = vmatpush1.bf16.msra.mxu0 %v720
    %808 = vmatprep.subr.bf16.mxu0 0
    %809 = vmatpush1.bf16.msra.mxu0 %v721
    %810 = vmatprep.subr.bf16.mxu0 0
    %811 = vmatpush1.bf16.msra.mxu0 0
    %812 = vmatprep.subr.bf16.mxu0 0
    %813 = vmatpush1.bf16.msra.mxu0 0
    %814 = vmatprep.subr.bf16.mxu0 0
    %815 = vmatpush1.bf16.msra.mxu0 0
    %816 = vmatprep.subr.bf16.mxu0 0
    %817 = vmatpush1.bf16.msra.mxu0 0
    %818 = vmatprep.subr.bf16.mxu0 0
    %819 = vmatpush1.bf16.msra.mxu0 0
    %820 = vmatprep.subr.bf16.mxu0 0
    %821 = vmatpush1.bf16.msra.mxu0 0
    %822 = vmatprep.subr.bf16.mxu0 0
    %823 = vmatpush1.bf16.msra.mxu0 0
    %824 = vmatprep.subr.bf16.mxu0 0
    %825 = vmatpush1.bf16.msra.mxu0 0
    %826 = vmatprep.subr.bf16.mxu0 0
    %827 = vmatpush1.bf16.msra.mxu0 0
    %828 = vmatprep.subr.bf16.mxu0 0
    %829 = vmatpush1.bf16.msra.mxu0 0
    %830 = vmatprep.subr.bf16.mxu0 0
    %831 = vmatpush1.bf16.msra.mxu0 0
    %832 = vmatprep.subr.bf16.mxu0 0
    %833 = vmatpush1.bf16.msra.mxu0 0
    %834 = vmatprep.mubr.bf16.mxu0 0
    %835 = vmatmul.mubr.bf16.gmra.mrb[0].mxu0 %v791
    %v836 = vpop.f32.mrb[0].mxu0
    %v837 = vadd.f32 %v733, %v836
    %v838 = vpop.f32.mrb[0].mxu0
    %v839 = vpop.f32.mrb[0].mxu0
    %v840 = vadd.f32 %v738, %v839
    %v841 = vpop.f32.mrb[0].mxu0
    %842 = vmatprep.mubr.bf16.mxu0 0
    %843 = vmatmul.mubr.bf16.gmra.mrb[0].mxu0 %v794
    %v844 = vpop.f32.mrb[0].mxu0
    %v845 = vadd.f32 %v743, %v844
    %v846 = vpop.f32.mrb[0].mxu0
    %v847 = vpop.f32.mrb[0].mxu0
    %v848 = vadd.f32 %v748, %v847
    %v849 = vpop.f32.mrb[0].mxu0
    %850 = vmatprep.mubr.bf16.mxu0 0
    %851 = vmatmul.mubr.bf16.gmra.mrb[0].mxu0 %v797
    %v852 = vpop.f32.mrb[0].mxu0
    %v853 = vadd.f32 %v753, %v852
    %v854 = vpop.f32.mrb[0].mxu0
    %v855 = vpop.f32.mrb[0].mxu0
    %v856 = vadd.f32 %v758, %v855
    %v857 = vpop.f32.mrb[0].mxu0
    %858 = vmatprep.mubr.bf16.mxu0 0
    %859 = vmatmul.mubr.bf16.gmra.mrb[0].mxu0 %v800
    %v860 = vpop.f32.mrb[0].mxu0
    %v861 = vadd.f32 %v763, %v860
    %v862 = vpop.f32.mrb[0].mxu0
    %v863 = vpop.f32.mrb[0].mxu0
    %v864 = vadd.f32 %v768, %v863
    %v865 = vpop.f32.mrb[0].mxu0
    %866 = vdwg.mxu0
    %v867 = vmax.f32 %v837, 0.0
    %v868 = vmax.f32 %v840, 0.0
    %v869 = vmax.f32 %v845, 0.0
    %v870 = vmax.f32 %v848, 0.0
    %v871 = vmax.f32 %v853, 0.0
    %v872 = vmax.f32 %v856, 0.0
    %v873 = vmax.f32 %v861, 0.0
    %v874 = vmax.f32 %v864, 0.0
    %v875 = vmul.f32 %v867, %v871
    %v876 = vmul.f32 %v868, %v872
    %v877 = vmul.f32 %v869, %v873
    %v878 = vmul.f32 %v870, %v874
    %v879 = vadd.f32 %v875, %v876
    %v880 = vadd.f32 %v879, %v877
    %v881 = vadd.f32 %v880, %v878
    %v882 = vrot.slane %v881, 4
    %v883 = vadd.f32 %v881, %v882
    %v884 = vrot.slane %v883, 2
    %v885 = vadd.f32 %v883, %v884
    %v886 = vrot.slane %v885, 1
    %v887 = vadd.f32 %v885, %v886
    %v888 = vmul.f32 %v536, %v540
    %v889 = vmul.f32 %v537, %v541
    %v890 = vmul.f32 %v538, %v542
    %v891 = vmul.f32 %v539, %v543
    %v892 = vadd.f32 %v888, %v889
    %v893 = vadd.f32 %v892, %v890
    %v894 = vadd.f32 %v893, %v891
    %v895 = vrot.slane %v894, 4
    %v896 = vadd.f32 %v894, %v895
    %v897 = vrot.slane %v896, 2
    %v898 = vadd.f32 %v896, %v897
    %v899 = vrot.slane %v898, 1
    %v900 = vadd.f32 %v898, %v899
    %v901 = vadd.f32 %v887, %v900
    %902 = vst [vmem:[#allocation2] sm:$0x1] %v901
    // Predicated region
    $region34: #{tpu_custom_call.1} parent=1 // pred_check
      _
    $region35: #{tpu_custom_call.1} parent=1 // pred_check_branch
      %904 = sbr.rel (0) target = $region37
    $region36: #{tpu_custom_call.1} parent=1 // pred_region
      %s906 = ssub.s32 16, 16
      %907 = vsyncadd [#allocation3], %s906
      %s909 = sshll.u32 [#allocation2], 4
      %s910 = int_to_ptr.vmem [resolvable:$true] %s909
      %912 = dma.vmem_to_hbm [thread:$0]  %s910, 16, %s8, [#allocation3]
    $region37: #{tpu_custom_call.1} parent=1 // pred_fallthru
      _
    // Predicated region
    $region38: #{tpu_custom_call.1} parent=1 // pred_check
      _
    $region39: #{tpu_custom_call.1} parent=1 // pred_check_branch
      %914 = sbr.rel (0) target = $region41
    $region40: #{tpu_custom_call.1} parent=1 // pred_region
      %915 = dma.done [#allocation3], 16
    $region41: #{tpu_custom_call.1} parent=1 // pred_fallthru
      _
    %916 = vsyncpa [#allocation3], 1

</llo_original>
